<compile_context>
chip_gen: v7x
topology: tpu7x:2x2x1
jax: 0.10.0
libtpu: 0.0.40
codegen_flags: <defaults>
</compile_context>

<pallas_src>
import jax
import jax.numpy as jnp
from jax.experimental import pallas as pl
from jax.experimental.pallas import tpu as pltpu

LANES = 128
SUBLANES = 8
MAX_TILE_ROWS = 8192   # 8192x128 f32 = 4 MiB per input block; 2 inputs x
                       # 2 buffers = 16 MiB (+ ~12 KiB scratch), covered by an
                       # explicit vmem_limit_bytes <= 32 MiB on every gen.


def _num_parallel_cores():
    """2-way grid split only on multi-TensorCore chips (v7x); else 1."""
    try:
        kind = jax.devices()[0].device_kind.lower()
    except Exception:
        return 1
    return 2 if ("v7" in kind or "7x" in kind) else 1


def _rows_to_vreg_sum(x):
    """Reduce an (R, 128) f32 tile to an (8, 128) partial sum.

    Pure VALU vreg-tree adds (no cross-lane XLU work).  R is statically padded
    to a multiple of 8 only in the tiny single-tile case."""
    r = x.shape[0]
    rpad = (-r) % SUBLANES
    if rpad:
        x = jnp.pad(x, ((0, rpad), (0, 0)))
    return jnp.sum(x.reshape(-1, SUBLANES, LANES), axis=0)


def _make_loss_kernel(tile_rows, tiles_per_core, rows_total, needs_mask):
    """Per-core (8,128) partial sums of |d|, d^2 and count(p > t)."""

    def kernel(p_ref, t_ref, out_ref, abs_acc, sq_acc, gt_acc):
        c = pl.program_id(0)   # core-split index (parallel)
        i = pl.program_id(1)   # row-tile index within this core (arbitrary)

        @pl.when(i == 0)
        def _():
            abs_acc[...] = jnp.zeros_like(abs_acc)
            sq_acc[...] = jnp.zeros_like(sq_acc)
            gt_acc[...] = jnp.zeros_like(gt_acc)

        p = p_ref[...].astype(jnp.float32)
        t = t_ref[...].astype(jnp.float32)
        d = p - t
        gt = (p > t).astype(jnp.float32)

        def accumulate(dd, gg):
            abs_acc[...] += _rows_to_vreg_sum(jnp.abs(dd))
            sq_acc[...] += _rows_to_vreg_sum(dd * dd)
            gt_acc[...] += _rows_to_vreg_sum(gg)

        if needs_mask:
            # Only the ragged last tile (and the clamped duplicate tile on the
            # second core when the tile count is odd) pays for the mask.
            tile_idx = c * tiles_per_core + i
            tile_start = tile_idx * tile_rows
            is_full = tile_start + tile_rows <= rows_total

            @pl.when(is_full)
            def _():
                accumulate(d, gt)

            @pl.when(jnp.logical_not(is_full))
            def _():
                row_ids = tile_start + jax.lax.broadcasted_iota(
                    jnp.int32, (tile_rows, LANES), 0)
                valid = row_ids < rows_total
                accumulate(jnp.where(valid, d, 0.0),
                           jnp.where(valid, gt, 0.0))
        else:
            accumulate(d, gt)

        @pl.when(i == pl.num_programs(1) - 1)
        def _():
            out_ref[0, 0, :, :] = abs_acc[...]
            out_ref[0, 1, :, :] = sq_acc[...]
            out_ref[0, 2, :, :] = gt_acc[...]

    return kernel


def _partial_sums(p2d, t2d):
    """Run the streaming kernel on a (rows, 128) slab; return 3 f32 scalars."""
    rows = p2d.shape[0]
    itemsize = jnp.dtype(p2d.dtype).itemsize

    tile_rows = min(rows, MAX_TILE_ROWS)
    num_tiles = -(-rows // tile_rows)
    par = _num_parallel_cores()
    if num_tiles < par:
        par = 1
    tiles_per_core = -(-num_tiles // par)
    needs_mask = (par * tiles_per_core * tile_rows != rows)

    kernel = _make_loss_kernel(tile_rows, tiles_per_core, rows, needs_mask)

    def in_map(c, i):
        # Clamp so a fully-out-of-range duplicate tile (odd tile count split
        # across cores) re-reads a valid tile; its contribution is masked.
        # TODO(synk): give the odd tile to one core via the index_map instead
        # of a clamped duplicate if the tile count is frequently odd.
        return (jnp.minimum(c * tiles_per_core + i, num_tiles - 1), 0)

    # VMEM budget: 2 inputs x 2 pipeline buffers + tiny scratch/output.
    in_block_bytes = tile_rows * LANES * itemsize
    vmem_need = 2 * 2 * in_block_bytes + 8 * SUBLANES * LANES * 4 + (1 << 20)
    vmem_limit = int(min(32 << 20, max(16 << 20, vmem_need + (4 << 20))))

    n_proc = rows * LANES
    cost = pl.CostEstimate(
        flops=7 * n_proc,
        transcendentals=0,
        bytes_accessed=2 * n_proc * itemsize + par * 3 * SUBLANES * LANES * 4,
    )

    out = pl.pallas_call(
        kernel,
        out_shape=jax.ShapeDtypeStruct((par, 3, SUBLANES, LANES), jnp.float32),
        grid_spec=pltpu.PrefetchScalarGridSpec(
            num_scalar_prefetch=0,
            grid=(par, tiles_per_core),
            in_specs=[
                pl.BlockSpec((tile_rows, LANES), in_map),
                pl.BlockSpec((tile_rows, LANES), in_map),
            ],
            out_specs=pl.BlockSpec((1, 3, SUBLANES, LANES),
                                   lambda c, i: (c, 0, 0, 0)),
            scratch_shapes=[
                pltpu.VMEM((SUBLANES, LANES), jnp.float32),
                pltpu.VMEM((SUBLANES, LANES), jnp.float32),
                pltpu.VMEM((SUBLANES, LANES), jnp.float32),
            ],
        ),
        compiler_params=pltpu.CompilerParams(
            dimension_semantics=("parallel", "arbitrary"),
            vmem_limit_bytes=vmem_limit,
        ),
        cost_estimate=cost,
    )(p2d, t2d)

    abs_sum = jnp.sum(out[:, 0])
    sq_sum = jnp.sum(out[:, 1])
    gt_cnt = jnp.sum(out[:, 2])
    return abs_sum, sq_sum, gt_cnt


def weighted_asym_mae_mse_loss(predictions, targets):
    assert predictions.shape == targets.shape
    total_n = int(predictions.size)

    p_flat = jnp.ravel(predictions)
    t_flat = jnp.ravel(targets)
    rows = total_n // LANES
    bulk = rows * LANES
    tail = total_n - bulk

    abs_sum = jnp.float32(0.0)
    sq_sum = jnp.float32(0.0)
    gt_cnt = jnp.float32(0.0)

    if rows > 0:
        p2d = p_flat[:bulk].reshape(rows, LANES)
        t2d = t_flat[:bulk].reshape(rows, LANES)
        a, s, g = _partial_sums(p2d, t2d)
        abs_sum += a
        sq_sum += s
        gt_cnt += g

    if tail > 0:
        # <128-element ragged tail handled with plain jnp: avoids a full-array
        # jnp.pad copy of both inputs just to round up to the 128-lane width.
        tp = p_flat[bulk:].astype(jnp.float32)
        tt = t_flat[bulk:].astype(jnp.float32)
        td = tp - tt
        abs_sum += jnp.sum(jnp.abs(td))
        sq_sum += jnp.sum(td * td)
        gt_cnt += jnp.sum((tp > tt).astype(jnp.float32))

    n = jnp.float32(total_n)
    mae = abs_sum / n
    mse = sq_sum / n
    # mean(where(p > t, mae, 2*mse)) = (cnt_gt*mae + cnt_le*2*mse) / N
    return (gt_cnt * mae + (n - gt_cnt) * (2.0 * mse)) / n


def _reference(predictions, targets):
    d = predictions - targets
    mae = jnp.mean(jnp.abs(d))
    mse = jnp.mean(d * d)
    loss = jnp.where(predictions > targets, mae, mse * 2.0)
    return jnp.mean(loss)


if __name__ == "__main__":
    key = jax.random.PRNGKey(0)
    kp, kt = jax.random.split(key)
    shape = (2, 4, 16, 16)  # NCHW-like predictions / targets
    predictions = jax.random.normal(kp, shape, dtype=jnp.float32)
    targets = jax.random.normal(kt, shape, dtype=jnp.float32)

    loss = weighted_asym_mae_mse_loss(predictions, targets)
    jax.block_until_ready(loss)

    ref = _reference(predictions, targets)
    assert jnp.allclose(loss, ref, rtol=1e-5, atol=1e-6), (loss, ref)
    print("KERNEL_OK")
</pallas_src>

<mosaic_0001>
module attributes {stable_mosaic.version = 11 : i64} {
  func.func @kernel(%arg0: i32, %arg1: i32, %arg2: memref<16x128xf32, #tpu.memory_space<vmem>>, %arg3: memref<16x128xf32, #tpu.memory_space<vmem>>, %arg4: memref<1x3x8x128xf32, #tpu.memory_space<vmem>>, %arg5: memref<8x128xf32, #tpu.memory_space<vmem>>, %arg6: memref<8x128xf32, #tpu.memory_space<vmem>>, %arg7: memref<8x128xf32, #tpu.memory_space<vmem>>) attributes {dimension_semantics = [#tpu.dimension_semantics<parallel>, #tpu.dimension_semantics<arbitrary>], iteration_bounds = array<i64: 1, 1>, scalar_prefetch = 0 : i64, scratch_operands = 3 : i64, tpu.core_type = #tpu.core_type<tc>, window_params = [{transform_indices = @transform_0, window_bounds = array<i64: 16, 128>}, {transform_indices = @transform_1, window_bounds = array<i64: 16, 128>}, {transform_indices = @transform_2, window_bounds = array<i64: 1, 3, 8, 128>}]} {
    %c0_i32 = arith.constant 0 : i32
    %0 = arith.cmpi eq, %arg1, %c0_i32 : i32
    %1 = arith.extui %0 : i1 to i32
    %c0_i32_0 = arith.constant 0 : i32
    %2 = arith.cmpi ne, %1, %c0_i32_0 : i32
    scf.if %2 {
      %cst_20 = arith.constant 0.000000e+00 : f32
      %29 = vector.broadcast %cst_20 : f32 to vector<8x128xf32>
      %c0_21 = arith.constant 0 : index
      %c0_22 = arith.constant 0 : index
      %30 = vector.load %arg5[%c0_21, %c0_22] : memref<8x128xf32, #tpu.memory_space<vmem>>, vector<8x128xf32>
      tpu.vector_store %arg5[%c0_21, %c0_22], %29 {strides = array<i32>} : memref<8x128xf32, #tpu.memory_space<vmem>>, vector<8x128xf32>,
      %cst_23 = arith.constant 0.000000e+00 : f32
      %31 = vector.broadcast %cst_23 : f32 to vector<8x128xf32>
      %c0_24 = arith.constant 0 : index
      %c0_25 = arith.constant 0 : index
      %32 = vector.load %arg6[%c0_24, %c0_25] : memref<8x128xf32, #tpu.memory_space<vmem>>, vector<8x128xf32>
      tpu.vector_store %arg6[%c0_24, %c0_25], %31 {strides = array<i32>} : memref<8x128xf32, #tpu.memory_space<vmem>>, vector<8x128xf32>,
      %cst_26 = arith.constant 0.000000e+00 : f32
      %33 = vector.broadcast %cst_26 : f32 to vector<8x128xf32>
      %c0_27 = arith.constant 0 : index
      %c0_28 = arith.constant 0 : index
      %34 = vector.load %arg7[%c0_27, %c0_28] : memref<8x128xf32, #tpu.memory_space<vmem>>, vector<8x128xf32>
      tpu.vector_store %arg7[%c0_27, %c0_28], %33 {strides = array<i32>} : memref<8x128xf32, #tpu.memory_space<vmem>>, vector<8x128xf32>,
    } else {
    }
    %c0 = arith.constant 0 : index
    %c0_1 = arith.constant 0 : index
    %3 = vector.load %arg2[%c0, %c0_1] : memref<16x128xf32, #tpu.memory_space<vmem>>, vector<16x128xf32>
    %c0_2 = arith.constant 0 : index
    %c0_3 = arith.constant 0 : index
    %4 = vector.load %arg3[%c0_2, %c0_3] : memref<16x128xf32, #tpu.memory_space<vmem>>, vector<16x128xf32>
    %5 = arith.subf %3, %4 : vector<16x128xf32>
    %6 = arith.cmpf ogt, %3, %4 : vector<16x128xf32>
    %7 = arith.extui %6 : vector<16x128xi1> to vector<16x128xi32>
    %8 = arith.sitofp %7 : vector<16x128xi32> to vector<16x128xf32>
    %c0_4 = arith.constant 0 : index
    %c0_5 = arith.constant 0 : index
    %9 = vector.load %arg5[%c0_4, %c0_5] : memref<8x128xf32, #tpu.memory_space<vmem>>, vector<8x128xf32>
    %10 = math.absf %5 : vector<16x128xf32>
    %11 = vector.shape_cast %10 : vector<16x128xf32> to vector<2x8x128xf32>
    %cst = arith.constant dense<0.000000e+00> : vector<8x128xf32>
    %12 = vector.multi_reduction <add>, %11, %cst [0] : vector<2x8x128xf32> to vector<8x128xf32>
    %13 = arith.addf %9, %12 : vector<8x128xf32>
    %c0_6 = arith.constant 0 : index
    %c0_7 = arith.constant 0 : index
    %14 = vector.load %arg5[%c0_6, %c0_7] : memref<8x128xf32, #tpu.memory_space<vmem>>, vector<8x128xf32>
    tpu.vector_store %arg5[%c0_6, %c0_7], %13 {strides = array<i32>} : memref<8x128xf32, #tpu.memory_space<vmem>>, vector<8x128xf32>,
    %c0_8 = arith.constant 0 : index
    %c0_9 = arith.constant 0 : index
    %15 = vector.load %arg6[%c0_8, %c0_9] : memref<8x128xf32, #tpu.memory_space<vmem>>, vector<8x128xf32>
    %16 = arith.mulf %5, %5 : vector<16x128xf32>
    %17 = vector.shape_cast %16 : vector<16x128xf32> to vector<2x8x128xf32>
    %cst_10 = arith.constant dense<0.000000e+00> : vector<8x128xf32>
    %18 = vector.multi_reduction <add>, %17, %cst_10 [0] : vector<2x8x128xf32> to vector<8x128xf32>
    %19 = arith.addf %15, %18 : vector<8x128xf32>
    %c0_11 = arith.constant 0 : index
    %c0_12 = arith.constant 0 : index
    %20 = vector.load %arg6[%c0_11, %c0_12] : memref<8x128xf32, #tpu.memory_space<vmem>>, vector<8x128xf32>
    tpu.vector_store %arg6[%c0_11, %c0_12], %19 {strides = array<i32>} : memref<8x128xf32, #tpu.memory_space<vmem>>, vector<8x128xf32>,
    %c0_13 = arith.constant 0 : index
    %c0_14 = arith.constant 0 : index
    %21 = vector.load %arg7[%c0_13, %c0_14] : memref<8x128xf32, #tpu.memory_space<vmem>>, vector<8x128xf32>
    %22 = vector.shape_cast %8 : vector<16x128xf32> to vector<2x8x128xf32>
    %cst_15 = arith.constant dense<0.000000e+00> : vector<8x128xf32>
    %23 = vector.multi_reduction <add>, %22, %cst_15 [0] : vector<2x8x128xf32> to vector<8x128xf32>
    %24 = arith.addf %21, %23 : vector<8x128xf32>
    %c0_16 = arith.constant 0 : index
    %c0_17 = arith.constant 0 : index
    %25 = vector.load %arg7[%c0_16, %c0_17] : memref<8x128xf32, #tpu.memory_space<vmem>>, vector<8x128xf32>
    tpu.vector_store %arg7[%c0_16, %c0_17], %24 {strides = array<i32>} : memref<8x128xf32, #tpu.memory_space<vmem>>, vector<8x128xf32>,
    %c0_i32_18 = arith.constant 0 : i32
    %26 = arith.cmpi eq, %arg1, %c0_i32_18 : i32
    %27 = arith.extui %26 : i1 to i32
    %c0_i32_19 = arith.constant 0 : i32
    %28 = arith.cmpi ne, %27, %c0_i32_19 : i32
    scf.if %28 {
      %c0_20 = arith.constant 0 : index
      %c0_21 = arith.constant 0 : index
      %29 = vector.load %arg5[%c0_20, %c0_21] : memref<8x128xf32, #tpu.memory_space<vmem>>, vector<8x128xf32>
      %c0_22 = arith.constant 0 : index
      %c0_23 = arith.constant 0 : index
      %c0_24 = arith.constant 0 : index
      %c0_25 = arith.constant 0 : index
      %30 = vector.load %arg4[%c0_22, %c0_23, %c0_24, %c0_25] : memref<1x3x8x128xf32, #tpu.memory_space<vmem>>, vector<1x1x8x128xf32>
      %31 = vector.shape_cast %30 : vector<1x1x8x128xf32> to vector<8x128xf32>
      %32 = vector.shape_cast %29 : vector<8x128xf32> to vector<1x1x8x128xf32>
      tpu.vector_store %arg4[%c0_22, %c0_23, %c0_24, %c0_25], %32 {strides = array<i32>} : memref<1x3x8x128xf32, #tpu.memory_space<vmem>>, vector<1x1x8x128xf32>,
      %c0_26 = arith.constant 0 : index
      %c0_27 = arith.constant 0 : index
      %33 = vector.load %arg6[%c0_26, %c0_27] : memref<8x128xf32, #tpu.memory_space<vmem>>, vector<8x128xf32>
      %c0_28 = arith.constant 0 : index
      %c1 = arith.constant 1 : index
      %c0_29 = arith.constant 0 : index
      %c0_30 = arith.constant 0 : index
      %34 = vector.load %arg4[%c0_28, %c1, %c0_29, %c0_30] : memref<1x3x8x128xf32, #tpu.memory_space<vmem>>, vector<1x1x8x128xf32>
      %35 = vector.shape_cast %34 : vector<1x1x8x128xf32> to vector<8x128xf32>
      %36 = vector.shape_cast %33 : vector<8x128xf32> to vector<1x1x8x128xf32>
      tpu.vector_store %arg4[%c0_28, %c1, %c0_29, %c0_30], %36 {strides = array<i32>} : memref<1x3x8x128xf32, #tpu.memory_space<vmem>>, vector<1x1x8x128xf32>,
      %c0_31 = arith.constant 0 : index
      %c0_32 = arith.constant 0 : index
      %37 = vector.load %arg7[%c0_31, %c0_32] : memref<8x128xf32, #tpu.memory_space<vmem>>, vector<8x128xf32>
      %c0_33 = arith.constant 0 : index
      %c2 = arith.constant 2 : index
      %c0_34 = arith.constant 0 : index
      %c0_35 = arith.constant 0 : index
      %38 = vector.load %arg4[%c0_33, %c2, %c0_34, %c0_35] : memref<1x3x8x128xf32, #tpu.memory_space<vmem>>, vector<1x1x8x128xf32>
      %39 = vector.shape_cast %38 : vector<1x1x8x128xf32> to vector<8x128xf32>
      %40 = vector.shape_cast %37 : vector<8x128xf32> to vector<1x1x8x128xf32>
      tpu.vector_store %arg4[%c0_33, %c2, %c0_34, %c0_35], %40 {strides = array<i32>} : memref<1x3x8x128xf32, #tpu.memory_space<vmem>>, vector<1x1x8x128xf32>,
    } else {
    }
    return
  }
  func.func @transform_0(%arg0: i32, %arg1: i32) -> (i32, i32) {
    %c1_i32 = arith.constant 1 : i32
    %0 = arith.muli %arg0, %c1_i32 : i32
    %1 = arith.addi %0, %arg1 : i32
    %c0_i32 = arith.constant 0 : i32
    %2 = arith.minsi %1, %c0_i32 : i32
    %c0_i32_0 = arith.constant 0 : i32
    %c0_i32_1 = arith.constant 0 : i32
    return %2, %c0_i32_0 : i32, i32
  }
  func.func @transform_1(%arg0: i32, %arg1: i32) -> (i32, i32) {
    %c1_i32 = arith.constant 1 : i32
    %0 = arith.muli %arg0, %c1_i32 : i32
    %1 = arith.addi %0, %arg1 : i32
    %c0_i32 = arith.constant 0 : i32
    %2 = arith.minsi %1, %c0_i32 : i32
    %c0_i32_0 = arith.constant 0 : i32
    %c0_i32_1 = arith.constant 0 : i32
    return %2, %c0_i32_0 : i32, i32
  }
  func.func @transform_2(%arg0: i32, %arg1: i32) -> (i32, i32, i32, i32) {
    %c0_i32 = arith.constant 0 : i32
    %c0_i32_0 = arith.constant 0 : i32
    %c0_i32_1 = arith.constant 0 : i32
    %c0_i32_2 = arith.constant 0 : i32
    return %arg0, %c0_i32, %c0_i32_0, %c0_i32_1 : i32, i32, i32, i32
  }
}

</mosaic_0001>

<llo_original>
// kernel: tpu_custom_call.1
$region0: #{tpu_custom_call.1}
  #allocation0 [shape = 'u32[]', space=smem, size = 0x4, offset = 0x4, fixed_abs, tag = 'smem constant byte address 0x4 - core index']
  #allocation1 [shape = 'u32[144,128]{1,0:T(1,128)}', space=vmem, size = 0x12000, scoped, tag = 'internal scratch']
  #allocation2 [shape = 'f32[8,128]{1,0:T(8,128)}', space=vmem, size = 0x1000, scoped, tag = 'scratch operand']
  #allocation3 [shape = 'f32[8,128]{1,0:T(8,128)}', space=vmem, size = 0x1000, scoped, tag = 'scratch operand']
  #allocation4 [shape = 'f32[8,128]{1,0:T(8,128)}', space=vmem, size = 0x1000, scoped, tag = 'scratch operand']
  %s0 = inlined_call_operand.hbm [shape: f32[16,128], index: 0, kind: input, shape index: {}]
  %s1 = inlined_call_operand.hbm [shape: f32[16,128], index: 1, kind: input, shape index: {}]
  %s2 = inlined_call_operand.hbm [shape: f32[1,3,8,128], index: 2, kind: output, shape index: {}]
  %s3 = sld [smem:[#allocation0]]
  $region34: #{tpu_custom_call.1} parent=0
    _
  %s5 = ssub.s32 1, %s3
  %s6 = scalar_select 0, %s5, %s3
  $region1: #{tpu_custom_call.1} parent=0
    #allocation5 [shape = 'u8[8192]{0}', space=vmem, size = 0x2000, scoped, tag = 'input window, operand 0, single buffered']
    #allocation6 [shape = 's32[1]{0}', space=sflag, size = 0x4, scoped, tag = 'scoped memory for tpu_custom_call.1']
    #allocation7 [shape = 's32[1]{0}', space=sflag, size = 0x4, scoped, tag = 'scoped memory for tpu_custom_call.1']
    #allocation8 [shape = 'u8[8192]{0}', space=vmem, size = 0x2000, scoped, tag = 'input window, operand 1, single buffered']
    #allocation9 [shape = 's32[1]{0}', space=sflag, size = 0x4, scoped, tag = 'scoped memory for tpu_custom_call.1']
    #allocation10 [shape = 'u8[12288]{0}', space=vmem, size = 0x3000, scoped, tag = 'output window, operand 0, single buffered']
    %7 = vsyncpa [#allocation6], 0
    %8 = vsyncpa [#allocation9], 0
    %9 = vsyncpa [#allocation7], 0
    // Predicated region
    $region2: #{tpu_custom_call.1} parent=1 // pred_check
      _
    $region3: #{tpu_custom_call.1} parent=1 // pred_check_branch
      %11 = sbr.rel (0) target = $region5
    $region4: #{tpu_custom_call.1} parent=1 // pred_region
      %s12 = sadd.s32 0, 0
      %p13 = scmp.lt.s32.totalorder %s12, 0
      %s14 = scalar_select %p13, %s12, 0
      %s15 = smul.u32 2, %s14
      %s17 = ssub.s32 256, 256
      %18 = vsyncadd [#allocation6], %s17
      %s19 = smul.addr %s15, 128
      %s20 = scalar_lea.hbm %s0, %s19
      %s21 = sshll.u32 [#allocation5], 4
      %s22 = int_to_ptr.vmem [resolvable:$true] %s21
      %27 = dma.hbm_to_vmem [thread:$0]  %s20, 256, %s22, [#allocation6], 128, 128, 8
    $region5: #{tpu_custom_call.1} parent=1 // pred_fallthru
      _
    // Predicated region
    $region6: #{tpu_custom_call.1} parent=1 // pred_check
      _
    $region7: #{tpu_custom_call.1} parent=1 // pred_check_branch
      %29 = sbr.rel (0) target = $region9
    $region8: #{tpu_custom_call.1} parent=1 // pred_region
      %s30 = sadd.s32 0, 0
      %p31 = scmp.lt.s32.totalorder %s30, 0
      %s32 = scalar_select %p31, %s30, 0
      %s33 = smul.u32 2, %s32
      %s35 = ssub.s32 256, 256
      %36 = vsyncadd [#allocation9], %s35
      %s37 = smul.addr %s33, 128
      %s38 = scalar_lea.hbm %s1, %s37
      %s39 = sshll.u32 [#allocation8], 4
      %s40 = int_to_ptr.vmem [resolvable:$true] %s39
      %45 = dma.hbm_to_vmem [thread:$0]  %s38, 256, %s40, [#allocation9], 128, 128, 8
    $region9: #{tpu_custom_call.1} parent=1 // pred_fallthru
      _
    // Predicated region
    $region10: #{tpu_custom_call.1} parent=1 // pred_check
      _
    $region11: #{tpu_custom_call.1} parent=1 // pred_check_branch
      %47 = sbr.rel (0) target = $region13
    $region12: #{tpu_custom_call.1} parent=1 // pred_region
      %48 = dma.done [#allocation6], 256
    $region13: #{tpu_custom_call.1} parent=1 // pred_fallthru
      _
    // Predicated region
    $region14: #{tpu_custom_call.1} parent=1 // pred_check
      _
    $region15: #{tpu_custom_call.1} parent=1 // pred_check_branch
      %50 = sbr.rel (0) target = $region17
    $region16: #{tpu_custom_call.1} parent=1 // pred_region
      %51 = dma.done [#allocation9], 256
    $region17: #{tpu_custom_call.1} parent=1 // pred_fallthru
      _
    %s52 = sadd.s32 0, 0
    %p53 = scmp.lt.s32.totalorder %s52, 0
    %s54 = scalar_select %p53, %s52, 0
    %s55 = smul.u32 2, %s54
    %s56 = sadd.s32 0, 0
    %p57 = scmp.lt.s32.totalorder %s56, 0
    %s58 = scalar_select %p57, %s56, 0
    %s59 = smul.u32 2, %s58
    %p60 = scmp.eq.s32.totalorder 0, 0
    // Predicated region
    $region18: #{tpu_custom_call.1} parent=1 // pred_check
      %p61 = pneg %p60
    $region19: #{tpu_custom_call.1} parent=1 // pred_check_branch
      %63 = sbr.rel (%p61) target = $region21
    $region20: #{tpu_custom_call.1} parent=1 // pred_region
      %64 = vst [vmem:[#allocation2] sm:$0xff] 0.0
      %65 = vst [vmem:[#allocation3] sm:$0xff] 0.0
      %66 = vst [vmem:[#allocation4] sm:$0xff] 0.0
    $region21: #{tpu_custom_call.1} parent=1 // pred_fallthru
      _
    %v67 = vld [vmem:[#allocation5] sm:$0xff]
    %v68 = vld [vmem:[#allocation5 + $0x8] sm:$0xff]
    %v69 = vld [vmem:[#allocation8] sm:$0xff]
    %v70 = vld [vmem:[#allocation8 + $0x8] sm:$0xff]
    %v71 = vsub.f32 %v67, %v69
    %v72 = vsub.f32 %v68, %v70
    %vm73 = vcmp.gt.f32.partialorder %v67, %v69
    %vm74 = vcmp.gt.f32.partialorder %v68, %v70
    %v75 = vsel %vm73, 1, 0
    %v76 = vsel %vm74, 1, 0
    %v77 = vcvt.s32.f32 %v75
    %v78 = vcvt.s32.f32 %v76
    %v79 = vld [vmem:[#allocation2] sm:$0xff]
    %v80 = vand.u32 2147483647, %v71
    %v81 = vand.u32 2147483647, %v72
    %v82 = vadd.f32 %v80, %v81
    %v83 = vadd.f32 %v79, %v82
    %84 = vst [vmem:[#allocation2] sm:$0xff] %v83
    %v85 = vld [vmem:[#allocation3] sm:$0xff]
    %v86 = vmul.f32 %v71, %v71
    %v87 = vmul.f32 %v72, %v72
    %v88 = vadd.f32 %v86, %v87
    %v89 = vadd.f32 %v85, %v88
    %90 = vst [vmem:[#allocation3] sm:$0xff] %v89
    %v91 = vld [vmem:[#allocation4] sm:$0xff]
    %v92 = vadd.f32 %v77, %v78
    %v93 = vadd.f32 %v91, %v92
    %94 = vst [vmem:[#allocation4] sm:$0xff] %v93
    // Predicated region
    $region22: #{tpu_custom_call.1} parent=1 // pred_check
      %p95 = pneg %p60
    $region23: #{tpu_custom_call.1} parent=1 // pred_check_branch
      %97 = sbr.rel (%p95) target = $region25
    $region24: #{tpu_custom_call.1} parent=1 // pred_region
      %v98 = vld [vmem:[#allocation2] sm:$0xff]
      %99 = vst [vmem:[#allocation10] sm:$0xff] %v98
      %v100 = vld [vmem:[#allocation3] sm:$0xff]
      %s101 = scalar_lea.vmem [#allocation10], 8
      %102 = vst [vmem:[%s101] sm:$0xff] %v100
      %v103 = vld [vmem:[#allocation4] sm:$0xff]
      %s104 = scalar_lea.vmem [#allocation10], 16
      %105 = vst [vmem:[%s104] sm:$0xff] %v103
    $region25: #{tpu_custom_call.1} parent=1 // pred_fallthru
      _
    // Predicated region
    $region26: #{tpu_custom_call.1} parent=1 // pred_check
      _
    $region27: #{tpu_custom_call.1} parent=1 // pred_check_branch
      %107 = sbr.rel (0) target = $region29
    $region28: #{tpu_custom_call.1} parent=1 // pred_region
      %s109 = ssub.s32 384, 384
      %110 = vsyncadd [#allocation7], %s109
      %s111 = sshll.u32 [#allocation10], 4
      %s112 = int_to_ptr.vmem [resolvable:$true] %s111
      %117 = dma.vmem_to_hbm [thread:$0]  %s112, 384, %s2, [#allocation7], 128, 128, 8
    $region29: #{tpu_custom_call.1} parent=1 // pred_fallthru
      _
    // Predicated region
    $region30: #{tpu_custom_call.1} parent=1 // pred_check
      _
    $region31: #{tpu_custom_call.1} parent=1 // pred_check_branch
      %119 = sbr.rel (0) target = $region33
    $region32: #{tpu_custom_call.1} parent=1 // pred_region
      %120 = dma.done [#allocation7], 384
    $region33: #{tpu_custom_call.1} parent=1 // pred_fallthru
      _
    %121 = vsyncpa [#allocation6], 1
    %122 = vsyncpa [#allocation9], 1
    %123 = vsyncpa [#allocation7], 1

</llo_original>
